<compile_context>
chip_gen: v5e
topology: v5e:2x2
jax: 0.10.0
libtpu: 0.0.40
codegen_flags: <defaults>
</compile_context>

<pallas_src>
import functools

import jax
import jax.numpy as jnp
from jax import lax
from jax.experimental import pallas as pl
from jax.experimental.pallas import tpu as pltpu


_BLOCK_CANDIDATES = (2048, 1024, 512, 256, 128)


def _vmem_caps():
    """Generation-aware VMEM sizing: (tile-selection budget, vmem_limit_bytes)."""
    cap = 64 * 1024 * 1024  # conservative fallback (v7x per-TC size)
    try:
        info = pltpu.get_tpu_info()
        cap = int(getattr(info, "vmem_capacity_bytes", cap)) or cap
    except Exception:
        pass
    # ~90 MiB budget / ~109 MiB limit on 128 MiB parts (v5e/v6e),
    # ~45 MiB budget / ~54 MiB limit on 64 MiB parts (v7x per TC).
    return int(cap * 0.70), int(cap * 0.85)


def _col_candidates(d):
    cands = [td for td in _BLOCK_CANDIDATES if td <= d and d % td == 0]
    return cands if cands else [d]


def _pick_block(d, need_bytes, budget, *, prefer_multi=False, min_multi=256):
    """Largest 128-aligned column block dividing D whose footprint fits budget.

    prefer_multi: among fitting blocks prefer the largest that still yields
    >= 2 grid blocks (keeps both v7x TensorCores busy) as long as it stays
    >= min_multi (so v5e never drops into HBM-bound tiny tiles).
    """
    cands = _col_candidates(d)
    fitting = [td for td in cands if need_bytes(td) <= budget]
    if not fitting:
        return cands[-1]
    if prefer_multi:
        multi = [td for td in fitting if d // td >= 2 and td >= min_multi]
        if multi:
            return multi[0]
    return fitting[0]


# -----------------------------------------------------------------------------
# Fused Gram-matrix path (default for 2N <= D).
# -----------------------------------------------------------------------------
def _gram_loss_kernel(za_ref, zb_ref, out_ref, ga_ref, gb_ref, dsum_ref, *,
                      lambda_param, n_batch, d_total, matmul_dtype):
    j = pl.program_id(0)
    nj = pl.num_programs(0)
    inv_nm1 = 1.0 / (n_batch - 1)     # unbiased (N-1) variance, like torch.std
    inv_n = 1.0 / n_batch

    @pl.when(j == 0)
    def _():
        ga_ref[...] = jnp.zeros_like(ga_ref)
        gb_ref[...] = jnp.zeros_like(gb_ref)
        dsum_ref[0] = 0.0
        dsum_ref[1] = 0.0

    # --- per-block batch-norm (f32 stats); 1/N of c folded into z_a's scale ---
    za = za_ref[...].astype(jnp.float32)
    mean_a = jnp.mean(za, axis=0, keepdims=True)
    za_c = za - mean_a
    var_a = jnp.sum(za_c * za_c, axis=0, keepdims=True) * inv_nm1
    za_n = za_c * (lax.rsqrt(var_a) * inv_n)

    zb = zb_ref[...].astype(jnp.float32)
    mean_b = jnp.mean(zb, axis=0, keepdims=True)
    zb_c = zb - mean_b
    var_b = jnp.sum(zb_c * zb_c, axis=0, keepdims=True) * inv_nm1
    zb_n = zb_c * lax.rsqrt(var_b)

    # --- f32 diagonal of c for this block: c_kk = sum_n za_n[n,k] * zb_n[n,k] ---
    diag = jnp.sum(za_n * zb_n, axis=0, keepdims=True)       # (1, td), f32
    dsum_ref[0] += jnp.sum(diag)                              # trace
    dsum_ref[1] += jnp.sum(diag * diag)                       # sum_k c_kk^2

    # --- accumulate the two N x N Gram matrices on the MXU (f32 accumulation) ---
    za_m = za_n.astype(matmul_dtype)
    zb_m = zb_n.astype(matmul_dtype)
    ga_ref[...] += lax.dot_general(za_m, za_m, (((1,), (1,)), ((), ())),
                                   preferred_element_type=jnp.float32)
    gb_ref[...] += lax.dot_general(zb_m, zb_m, (((1,), (1,)), ((), ())),
                                   preferred_element_type=jnp.float32)

    @pl.when(j == nj - 1)
    def _():
        # sum(c o c) = sum(Ga o Gb)   (1/N^2 is folded into Ga).
        sum_c2 = jnp.sum(ga_ref[...] * gb_ref[...])
        lam = lambda_param
        loss = (lam * sum_c2 + (1.0 - lam) * dsum_ref[1]
                - 2.0 * dsum_ref[0] + float(d_total))
        rr = lax.broadcasted_iota(jnp.int32, (8, 128), 0)
        cc = lax.broadcasted_iota(jnp.int32, (8, 128), 1)
        out_ref[...] = jnp.where((rr == 0) & (cc == 0), loss, 0.0)


def _loss_gram(z_a, z_b, lambda_param, matmul_dtype, block_d, budget, limit):
    n, d = z_a.shape
    fixed = 20 * n * n * 4          # ga + gb scratches + matmul / product temps (f32)
    if block_d is None:
        block_d = _pick_block(d, lambda t: fixed + 48 * n * t, budget)
    assert d % block_d == 0, (d, block_d)
    grid = (d // block_d,)

    kernel = functools.partial(
        _gram_loss_kernel, lambda_param=float(lambda_param), n_batch=n,
        d_total=d, matmul_dtype=matmul_dtype)

    out = pl.pallas_call(
        kernel,
        out_shape=jax.ShapeDtypeStruct((8, 128), jnp.float32),
        grid_spec=pltpu.PrefetchScalarGridSpec(
            num_scalar_prefetch=0,
            grid=grid,
            in_specs=[pl.BlockSpec((n, block_d), lambda j: (0, j)),
                      pl.BlockSpec((n, block_d), lambda j: (0, j))],
            out_specs=pl.BlockSpec((8, 128), lambda j: (0, 0)),
            scratch_shapes=[
                pltpu.VMEM((n, n), jnp.float32),     # Ga accumulator
                pltpu.VMEM((n, n), jnp.float32),     # Gb accumulator
                pltpu.SMEM((2,), jnp.float32),       # [trace, sum c_kk^2]
            ]),
        compiler_params=pltpu.CompilerParams(
            dimension_semantics=("arbitrary",),
            vmem_limit_bytes=limit),
        cost_estimate=pl.CostEstimate(
            flops=int(4 * n * n * d + 12 * n * d),
            transcendentals=int(2 * d),
            bytes_accessed=int(2 * n * d * z_a.dtype.itemsize + 8 * 128 * 4)),
    )(z_a, z_b)
    return out[0, 0]


# -----------------------------------------------------------------------------
# Direct (D x D tiled) path for large N: prologue + correlation kernel.
# -----------------------------------------------------------------------------
def _normalize_kernel(za_ref, zb_ref, za_out_ref, zb_out_ref, diag_ref, *,
                      inv_nm1, inv_n, out_dtype):
    za = za_ref[...].astype(jnp.float32)
    mean_a = jnp.mean(za, axis=0, keepdims=True)
    za_c = za - mean_a
    var_a = jnp.sum(za_c * za_c, axis=0, keepdims=True) * inv_nm1
    za_n = za_c * (lax.rsqrt(var_a) * inv_n)     # 1/N of c folded into z_a

    zb = zb_ref[...].astype(jnp.float32)
    mean_b = jnp.mean(zb, axis=0, keepdims=True)
    zb_c = zb - mean_b
    var_b = jnp.sum(zb_c * zb_c, axis=0, keepdims=True) * inv_nm1
    zb_n = zb_c * lax.rsqrt(var_b)

    # f32 diagonal of c: c_kk = sum_n za_n[n,k] * zb_n[n,k]
    diag_ref[...] = jnp.sum(za_n * zb_n, axis=0, keepdims=True)
    za_out_ref[...] = za_n.astype(out_dtype)
    zb_out_ref[...] = zb_n.astype(out_dtype)


def _normalize_prologue(z_a, z_b, matmul_dtype, budget, limit):
    n, d = z_a.shape
    mm_bytes = jnp.dtype(matmul_dtype).itemsize
    td = _pick_block(d, lambda t: 52 * n * t, budget, prefer_multi=True)
    kernel = functools.partial(
        _normalize_kernel, inv_nm1=1.0 / (n - 1), inv_n=1.0 / n,
        out_dtype=matmul_dtype)
    return pl.pallas_call(
        kernel,
        out_shape=(jax.ShapeDtypeStruct((n, d), matmul_dtype),
                   jax.ShapeDtypeStruct((n, d), matmul_dtype),
                   jax.ShapeDtypeStruct((1, d), jnp.float32)),
        grid_spec=pltpu.PrefetchScalarGridSpec(
            num_scalar_prefetch=0,
            grid=(d // td,),
            in_specs=[pl.BlockSpec((n, td), lambda j: (0, j)),
                      pl.BlockSpec((n, td), lambda j: (0, j))],
            out_specs=[pl.BlockSpec((n, td), lambda j: (0, j)),
                       pl.BlockSpec((n, td), lambda j: (0, j)),
                       pl.BlockSpec((1, td), lambda j: (0, j))]),
        compiler_params=pltpu.CompilerParams(
            dimension_semantics=("parallel",),
            vmem_limit_bytes=limit),
        cost_estimate=pl.CostEstimate(
            flops=int(10 * n * d),
            transcendentals=int(2 * d),
            bytes_accessed=int(2 * n * d * z_a.dtype.itemsize
                               + 2 * n * d * mm_bytes + 4 * d)),
    )(z_a, z_b)


def _corr_sq_kernel(za_ref, zb_ref, out_ref, acc_ref):
    bj = pl.program_id(1)
    nj = pl.num_programs(1)

    @pl.when(bj == 0)
    def _():
        acc_ref[...] = jnp.zeros_like(acc_ref)

    # (td, td) tile of c = za_n^T @ zb_n (1/N already folded into za_n), f32 acc.
    c_tile = lax.dot_general(za_ref[...], zb_ref[...],
                             (((0,), (0,)), ((), ())),
                             preferred_element_type=jnp.float32)
    acc_ref[0:1, 0:1] += jnp.sum(c_tile * c_tile)

    @pl.when(bj == nj - 1)
    def _():
        out_ref[...] = acc_ref[...]       # plain, unmasked (8,128) store


def _loss_direct(z_a, z_b, lambda_param, matmul_dtype, block_d, budget, limit):
    n, d = z_a.shape
    mm_bytes = jnp.dtype(matmul_dtype).itemsize

    # One-pass normalization prologue: bf16 normalized slabs + f32 diagonal.
    za_n, zb_n, diag = _normalize_prologue(z_a, z_b, matmul_dtype, budget, limit)

    if block_d is None:
        # Footprint: 2 inputs x 2 pipeline bufs + c_tile & its square (f32) + acc.
        block_d = _pick_block(
            d, lambda t: 4 * n * t * mm_bytes + 8 * t * t + 8 * 128 * 4,
            budget, prefer_multi=True)
    assert d % block_d == 0, (d, block_d)
    nb = d // block_d

    partial = pl.pallas_call(
        _corr_sq_kernel,
        out_shape=jax.ShapeDtypeStruct((nb * 8, 128), jnp.float32),
        grid_spec=pltpu.PrefetchScalarGridSpec(
            num_scalar_prefetch=0,
            grid=(nb, nb),                         # i (rows of c) outer, j inner
            in_specs=[pl.BlockSpec((n, block_d), lambda i, j: (0, i)),
                      pl.BlockSpec((n, block_d), lambda i, j: (0, j))],
            out_specs=pl.BlockSpec((8, 128), lambda i, j: (i, 0)),
            scratch_shapes=[pltpu.VMEM((8, 128), jnp.float32)]),
        compiler_params=pltpu.CompilerParams(
            dimension_semantics=("parallel", "arbitrary"),
            vmem_limit_bytes=limit),
        cost_estimate=pl.CostEstimate(
            flops=int(2 * n * d * d),
            transcendentals=0,
            bytes_accessed=int((nb + 1) * n * d * mm_bytes + nb * 8 * 128 * 4)),
    )(za_n, zb_n)

    lam = float(lambda_param)
    sum_c2 = jnp.sum(partial)
    trace = jnp.sum(diag)
    trsq = jnp.sum(diag * diag)
    return lam * sum_c2 + (1.0 - lam) * trsq - 2.0 * trace + float(d)


# -----------------------------------------------------------------------------
# Public entry point.
# -----------------------------------------------------------------------------
def barlow_twins_loss(z_a, z_b, lambda_param=5e-3, *, matmul_dtype=jnp.bfloat16,
                      block_d=None, use_gram=None):
    """Pallas TPU implementation of BarlowTwinsCriterion.forward.

    z_a, z_b: (N, D) arrays (N >= 2).  Returns a scalar float32 loss.
    matmul_dtype: dtype fed to the MXU (stats / diagonal stay f32).
    use_gram: None = auto (Gram path when 2N <= D and the N x N Grams fit
    comfortably in VMEM), or force True/False.
    """
    assert z_a.shape == z_b.shape and z_a.ndim == 2
    n, d = z_a.shape
    assert n >= 2, "Barlow Twins needs at least 2 samples (unbiased std)."

    budget, limit = _vmem_caps()
    if use_gram is None:
        use_gram = (2 * n <= d) and (20 * n * n * 4 <= budget // 2)
    if use_gram:
        return _loss_gram(z_a, z_b, lambda_param, matmul_dtype, block_d,
                          budget, limit)
    return _loss_direct(z_a, z_b, lambda_param, matmul_dtype, block_d,
                        budget, limit)


def _reference_loss(z_a, z_b, lambda_param):
    # Pure-JAX reference mirroring the PyTorch module (torch.std is unbiased).
    n, d = z_a.shape
    za_n = (z_a - z_a.mean(0)) / z_a.std(0, ddof=1)
    zb_n = (z_b - z_b.mean(0)) / z_b.std(0, ddof=1)
    c = za_n.T @ zb_n / n
    eye = jnp.eye(d)
    c_diff = (c - eye) ** 2
    c_diff = jnp.where(eye > 0, c_diff, c_diff * lambda_param)
    return c_diff.sum()


if __name__ == "__main__":
    key = jax.random.PRNGKey(0)
    lam = 5e-3
    k1, k2, k3, k4 = jax.random.split(key, 4)

    # Case 1: tiny shape, Gram path, f32 MXU inputs (near-exact parity).
    za = jax.random.normal(k1, (8, 32), dtype=jnp.float32)
    zb = jax.random.normal(k2, (8, 32), dtype=jnp.float32)
    ref = _reference_loss(za, zb, lam)
    loss = jax.block_until_ready(
        barlow_twins_loss(za, zb, lam, matmul_dtype=jnp.float32))
    assert jnp.allclose(loss, ref, rtol=1e-3, atol=1e-3), (loss, ref)

    # Case 2: Gram path, default bf16 MXU inputs (f32 stats / diag / accum).
    za2 = jax.random.normal(k3, (16, 256), dtype=jnp.float32)
    zb2 = jax.random.normal(k4, (16, 256), dtype=jnp.float32)
    ref2 = _reference_loss(za2, zb2, lam)
    loss2 = jax.block_until_ready(barlow_twins_loss(za2, zb2, lam))
    assert jnp.allclose(loss2, ref2, rtol=2e-2, atol=1e-1), (loss2, ref2)

    # Case 3: forced direct path (prologue + 2x2 tiled correlation), f32 MXU.
    loss3 = jax.block_until_ready(
        barlow_twins_loss(za2, zb2, lam, matmul_dtype=jnp.float32,
                          block_d=128, use_gram=False))
    assert jnp.allclose(loss3, ref2, rtol=1e-3, atol=1e-3), (loss3, ref2)

    # Case 4: forced direct path, default bf16 MXU inputs.
    loss4 = jax.block_until_ready(
        barlow_twins_loss(za2, zb2, lam, block_d=128, use_gram=False))
    assert jnp.allclose(loss4, ref2, rtol=2e-2, atol=1e-1), (loss4, ref2)

    print("KERNEL_OK")
</pallas_src>

<mosaic_0001>
module attributes {stable_mosaic.version = 11 : i64} {
  func.func @_gram_loss_kernel(%arg0: i32, %arg1: memref<8x32xf32, #tpu.memory_space<vmem>>, %arg2: memref<8x32xf32, #tpu.memory_space<vmem>>, %arg3: memref<8x128xf32, #tpu.memory_space<vmem>>, %arg4: memref<8x8xf32, #tpu.memory_space<vmem>>, %arg5: memref<8x8xf32, #tpu.memory_space<vmem>>, %arg6: memref<2xf32, #tpu.memory_space<smem>>) attributes {dimension_semantics = [#tpu.dimension_semantics<arbitrary>], iteration_bounds = array<i64: 1>, scalar_prefetch = 0 : i64, scratch_operands = 3 : i64, tpu.core_type = #tpu.core_type<tc>, window_params = [{transform_indices = @transform_0, window_bounds = array<i64: 8, 32>}, {transform_indices = @transform_1, window_bounds = array<i64: 8, 32>}, {pipeline_mode = #tpu.pipeline_mode<synchronous>, transform_indices = @transform_2, window_bounds = array<i64: 8, 128>}]} {
    %c0_i32 = arith.constant 0 : i32
    %0 = arith.cmpi eq, %arg0, %c0_i32 : i32
    %1 = arith.extui %0 : i1 to i32
    %c0_i32_0 = arith.constant 0 : i32
    %2 = arith.cmpi ne, %1, %c0_i32_0 : i32
    scf.if %2 {
      %cst_30 = arith.constant 0.000000e+00 : f32
      %64 = vector.broadcast %cst_30 : f32 to vector<8x8xf32>
      %c0_31 = arith.constant 0 : index
      %c0_32 = arith.constant 0 : index
      %65 = vector.load %arg4[%c0_31, %c0_32] : memref<8x8xf32, #tpu.memory_space<vmem>>, vector<8x8xf32>
      tpu.vector_store %arg4[%c0_31, %c0_32], %64 {strides = array<i32>} : memref<8x8xf32, #tpu.memory_space<vmem>>, vector<8x8xf32>,
      %cst_33 = arith.constant 0.000000e+00 : f32
      %66 = vector.broadcast %cst_33 : f32 to vector<8x8xf32>
      %c0_34 = arith.constant 0 : index
      %c0_35 = arith.constant 0 : index
      %67 = vector.load %arg5[%c0_34, %c0_35] : memref<8x8xf32, #tpu.memory_space<vmem>>, vector<8x8xf32>
      tpu.vector_store %arg5[%c0_34, %c0_35], %66 {strides = array<i32>} : memref<8x8xf32, #tpu.memory_space<vmem>>, vector<8x8xf32>,
      %cst_36 = arith.constant 0.000000e+00 : f32
      %c0_37 = arith.constant 0 : index
      %68 = memref.load %arg6[%c0_37] : memref<2xf32, #tpu.memory_space<smem>>
      memref.store %cst_36, %arg6[%c0_37] : memref<2xf32, #tpu.memory_space<smem>>
      %cst_38 = arith.constant 0.000000e+00 : f32
      %c1_39 = arith.constant 1 : index
      %69 = memref.load %arg6[%c1_39] : memref<2xf32, #tpu.memory_space<smem>>
      memref.store %cst_38, %arg6[%c1_39] : memref<2xf32, #tpu.memory_space<smem>>
    } else {
    }
    %c0 = arith.constant 0 : index
    %c0_1 = arith.constant 0 : index
    %3 = vector.load %arg1[%c0, %c0_1] : memref<8x32xf32, #tpu.memory_space<vmem>>, vector<8x32xf32>
    %cst = arith.constant dense<0.000000e+00> : vector<32xf32>
    %4 = vector.multi_reduction <add>, %3, %cst [0] : vector<8x32xf32> to vector<32xf32>
    %5 = vector.shape_cast %4 : vector<32xf32> to vector<1x32xf32>
    %cst_2 = arith.constant 8.000000e+00 : f32
    %6 = vector.broadcast %cst_2 : f32 to vector<1x32xf32>
    %7 = arith.divf %5, %6 : vector<1x32xf32>
    %8 = vector.broadcast %7 : vector<1x32xf32> to vector<8x32xf32>
    %9 = arith.subf %3, %8 : vector<8x32xf32>
    %10 = arith.mulf %9, %9 : vector<8x32xf32>
    %cst_3 = arith.constant dense<0.000000e+00> : vector<32xf32>
    %11 = vector.multi_reduction <add>, %10, %cst_3 [0] : vector<8x32xf32> to vector<32xf32>
    %12 = vector.shape_cast %11 : vector<32xf32> to vector<1x32xf32>
    %cst_4 = arith.constant 0.142857149 : f32
    %13 = vector.broadcast %cst_4 : f32 to vector<1x32xf32>
    %14 = arith.mulf %12, %13 : vector<1x32xf32>
    %15 = math.rsqrt %14 : vector<1x32xf32>
    %cst_5 = arith.constant 1.250000e-01 : f32
    %16 = vector.broadcast %cst_5 : f32 to vector<1x32xf32>
    %17 = arith.mulf %15, %16 : vector<1x32xf32>
    %18 = vector.broadcast %17 : vector<1x32xf32> to vector<8x32xf32>
    %19 = arith.mulf %9, %18 : vector<8x32xf32>
    %c0_6 = arith.constant 0 : index
    %c0_7 = arith.constant 0 : index
    %20 = vector.load %arg2[%c0_6, %c0_7] : memref<8x32xf32, #tpu.memory_space<vmem>>, vector<8x32xf32>
    %cst_8 = arith.constant dense<0.000000e+00> : vector<32xf32>
    %21 = vector.multi_reduction <add>, %20, %cst_8 [0] : vector<8x32xf32> to vector<32xf32>
    %22 = vector.shape_cast %21 : vector<32xf32> to vector<1x32xf32>
    %cst_9 = arith.constant 8.000000e+00 : f32
    %23 = vector.broadcast %cst_9 : f32 to vector<1x32xf32>
    %24 = arith.divf %22, %23 : vector<1x32xf32>
    %25 = vector.broadcast %24 : vector<1x32xf32> to vector<8x32xf32>
    %26 = arith.subf %20, %25 : vector<8x32xf32>
    %27 = arith.mulf %26, %26 : vector<8x32xf32>
    %cst_10 = arith.constant dense<0.000000e+00> : vector<32xf32>
    %28 = vector.multi_reduction <add>, %27, %cst_10 [0] : vector<8x32xf32> to vector<32xf32>
    %29 = vector.shape_cast %28 : vector<32xf32> to vector<1x32xf32>
    %cst_11 = arith.constant 0.142857149 : f32
    %30 = vector.broadcast %cst_11 : f32 to vector<1x32xf32>
    %31 = arith.mulf %29, %30 : vector<1x32xf32>
    %32 = math.rsqrt %31 : vector<1x32xf32>
    %33 = vector.broadcast %32 : vector<1x32xf32> to vector<8x32xf32>
    %34 = arith.mulf %26, %33 : vector<8x32xf32>
    %35 = arith.mulf %19, %34 : vector<8x32xf32>
    %cst_12 = arith.constant dense<0.000000e+00> : vector<32xf32>
    %36 = vector.multi_reduction <add>, %35, %cst_12 [0] : vector<8x32xf32> to vector<32xf32>
    %37 = vector.shape_cast %36 : vector<32xf32> to vector<1x32xf32>
    %c0_13 = arith.constant 0 : index
    %38 = memref.load %arg6[%c0_13] : memref<2xf32, #tpu.memory_space<smem>>
    %39 = vector.shape_cast %37 : vector<1x32xf32> to vector<1x1x32xf32>
    %cst_14 = arith.constant dense<0.000000e+00> : vector<1xf32>
    %40 = vector.multi_reduction <add>, %39, %cst_14 [1, 2] : vector<1x1x32xf32> to vector<1xf32>
    %41 = vector.shape_cast %40 : vector<1xf32> to vector<1x1x1xf32>
    %42 = vector.extract %41[0, 0, 0] : f32 from vector<1x1x1xf32>
    %43 = arith.addf %38, %42 : f32
    %c0_15 = arith.constant 0 : index
    %44 = memref.load %arg6[%c0_15] : memref<2xf32, #tpu.memory_space<smem>>
    memref.store %43, %arg6[%c0_15] : memref<2xf32, #tpu.memory_space<smem>>
    %c1 = arith.constant 1 : index
    %45 = memref.load %arg6[%c1] : memref<2xf32, #tpu.memory_space<smem>>
    %46 = arith.mulf %37, %37 : vector<1x32xf32>
    %47 = vector.shape_cast %46 : vector<1x32xf32> to vector<1x1x32xf32>
    %cst_16 = arith.constant dense<0.000000e+00> : vector<1xf32>
    %48 = vector.multi_reduction <add>, %47, %cst_16 [1, 2] : vector<1x1x32xf32> to vector<1xf32>
    %49 = vector.shape_cast %48 : vector<1xf32> to vector<1x1x1xf32>
    %50 = vector.extract %49[0, 0, 0] : f32 from vector<1x1x1xf32>
    %51 = arith.addf %45, %50 : f32
    %c1_17 = arith.constant 1 : index
    %52 = memref.load %arg6[%c1_17] : memref<2xf32, #tpu.memory_space<smem>>
    memref.store %51, %arg6[%c1_17] : memref<2xf32, #tpu.memory_space<smem>>
    %c0_18 = arith.constant 0 : index
    %c0_19 = arith.constant 0 : index
    %53 = vector.load %arg4[%c0_18, %c0_19] : memref<8x8xf32, #tpu.memory_space<vmem>>, vector<8x8xf32>
    %cst_20 = arith.constant dense<0.000000e+00> : vector<8x8xf32>
    %54 = tpu.matmul %19, %19, %cst_20 {dimension_numbers = #tpu.dot_dimension_numbers<[1], [1], [0], [0], [0, 0, 1, 0], [], []>} : vector<8x32xf32>, vector<8x32xf32>, vector<8x8xf32> -> vector<8x8xf32>
    %55 = arith.addf %53, %54 : vector<8x8xf32>
    %c0_21 = arith.constant 0 : index
    %c0_22 = arith.constant 0 : index
    %56 = vector.load %arg4[%c0_21, %c0_22] : memref<8x8xf32, #tpu.memory_space<vmem>>, vector<8x8xf32>
    tpu.vector_store %arg4[%c0_21, %c0_22], %55 {strides = array<i32>} : memref<8x8xf32, #tpu.memory_space<vmem>>, vector<8x8xf32>,
    %c0_23 = arith.constant 0 : index
    %c0_24 = arith.constant 0 : index
    %57 = vector.load %arg5[%c0_23, %c0_24] : memref<8x8xf32, #tpu.memory_space<vmem>>, vector<8x8xf32>
    %cst_25 = arith.constant dense<0.000000e+00> : vector<8x8xf32>
    %58 = tpu.matmul %34, %34, %cst_25 {dimension_numbers = #tpu.dot_dimension_numbers<[1], [1], [0], [0], [0, 0, 1, 0], [], []>} : vector<8x32xf32>, vector<8x32xf32>, vector<8x8xf32> -> vector<8x8xf32>
    %59 = arith.addf %57, %58 : vector<8x8xf32>
    %c0_26 = arith.constant 0 : index
    %c0_27 = arith.constant 0 : index
    %60 = vector.load %arg5[%c0_26, %c0_27] : memref<8x8xf32, #tpu.memory_space<vmem>>, vector<8x8xf32>
    tpu.vector_store %arg5[%c0_26, %c0_27], %59 {strides = array<i32>} : memref<8x8xf32, #tpu.memory_space<vmem>>, vector<8x8xf32>,
    %c0_i32_28 = arith.constant 0 : i32
    %61 = arith.cmpi eq, %arg0, %c0_i32_28 : i32
    %62 = arith.extui %61 : i1 to i32
    %c0_i32_29 = arith.constant 0 : i32
    %63 = arith.cmpi ne, %62, %c0_i32_29 : i32
    scf.if %63 {
      %c0_30 = arith.constant 0 : index
      %c0_31 = arith.constant 0 : index
      %64 = vector.load %arg4[%c0_30, %c0_31] : memref<8x8xf32, #tpu.memory_space<vmem>>, vector<8x8xf32>
      %c0_32 = arith.constant 0 : index
      %c0_33 = arith.constant 0 : index
      %65 = vector.load %arg5[%c0_32, %c0_33] : memref<8x8xf32, #tpu.memory_space<vmem>>, vector<8x8xf32>
      %66 = arith.mulf %64, %65 : vector<8x8xf32>
      %67 = vector.shape_cast %66 : vector<8x8xf32> to vector<1x8x8xf32>
      %cst_34 = arith.constant dense<0.000000e+00> : vector<1xf32>
      %68 = vector.multi_reduction <add>, %67, %cst_34 [1, 2] : vector<1x8x8xf32> to vector<1xf32>
      %69 = vector.shape_cast %68 : vector<1xf32> to vector<1x1x1xf32>
      %70 = vector.extract %69[0, 0, 0] : f32 from vector<1x1x1xf32>
      %cst_35 = arith.constant 5.000000e-03 : f32
      %71 = arith.mulf %cst_35, %70 : f32
      %c1_36 = arith.constant 1 : index
      %72 = memref.load %arg6[%c1_36] : memref<2xf32, #tpu.memory_space<smem>>
      %cst_37 = arith.constant 9.950000e-01 : f32
      %73 = arith.mulf %cst_37, %72 : f32
      %74 = arith.addf %71, %73 : f32
      %c0_38 = arith.constant 0 : index
      %75 = memref.load %arg6[%c0_38] : memref<2xf32, #tpu.memory_space<smem>>
      %cst_39 = arith.constant 2.000000e+00 : f32
      %76 = arith.mulf %cst_39, %75 : f32
      %77 = arith.subf %74, %76 : f32
      %cst_40 = arith.constant 3.200000e+01 : f32
      %78 = arith.addf %77, %cst_40 : f32
      %79 = tpu.iota {dimensions = array<i32: 0>} : vector<8x128xi32>
      %80 = tpu.iota {dimensions = array<i32: 1>} : vector<8x128xi32>
      %c0_i32_41 = arith.constant 0 : i32
      %81 = vector.broadcast %c0_i32_41 : i32 to vector<8x128xi32>
      %82 = arith.cmpi eq, %79, %81 : vector<8x128xi32>
      %c0_i32_42 = arith.constant 0 : i32
      %83 = vector.broadcast %c0_i32_42 : i32 to vector<8x128xi32>
      %84 = arith.cmpi eq, %80, %83 : vector<8x128xi32>
      %85 = arith.andi %82, %84 : vector<8x128xi1>
      %cst_43 = arith.constant 0.000000e+00 : f32
      %86 = vector.broadcast %78 : f32 to vector<8x128xf32>
      %87 = vector.broadcast %cst_43 : f32 to vector<8x128xf32>
      %88 = arith.select %85, %86, %87 : vector<8x128xi1>, vector<8x128xf32>
      %c0_44 = arith.constant 0 : index
      %c0_45 = arith.constant 0 : index
      %89 = vector.load %arg3[%c0_44, %c0_45] : memref<8x128xf32, #tpu.memory_space<vmem>>, vector<8x128xf32>
      tpu.vector_store %arg3[%c0_44, %c0_45], %88 {strides = array<i32>} : memref<8x128xf32, #tpu.memory_space<vmem>>, vector<8x128xf32>,
    } else {
    }
    return
  }
  func.func @transform_0(%arg0: i32) -> (i32, i32) {
    %c0_i32 = arith.constant 0 : i32
    %c0_i32_0 = arith.constant 0 : i32
    return %c0_i32, %arg0 : i32, i32
  }
  func.func @transform_1(%arg0: i32) -> (i32, i32) {
    %c0_i32 = arith.constant 0 : i32
    %c0_i32_0 = arith.constant 0 : i32
    return %c0_i32, %arg0 : i32, i32
  }
  func.func @transform_2(%arg0: i32) -> (i32, i32) {
    %c0_i32 = arith.constant 0 : i32
    %c0_i32_0 = arith.constant 0 : i32
    %c0_i32_1 = arith.constant 0 : i32
    return %c0_i32, %c0_i32_0 : i32, i32
  }
}

</mosaic_0001>

<llo_original>
// kernel: tpu_custom_call.1
$region0: #{tpu_custom_call.1}
  #allocation0 [shape = 'u32[]', space=smem, size = 0x4, offset = 0x4, fixed_abs, tag = 'smem constant byte address 0x4 - core index']
  #allocation1 [shape = 'u32[72,128]{1,0:T(1,128)}', space=vmem, size = 0x9000, scoped, tag = 'internal scratch']
  #allocation2 [shape = 'f32[8,8]{1,0:T(8,128)}', space=vmem, size = 0x1000, scoped, tag = 'scratch operand']
  #allocation3 [shape = 'f32[8,8]{1,0:T(8,128)}', space=vmem, size = 0x1000, scoped, tag = 'scratch operand']
  #allocation4 [shape = 'f32[2]{0:T(128)}', space=smem, size = 0x200, scoped, tag = 'scratch operand']
  %s0 = inlined_call_operand.hbm [shape: f32[8,32], index: 0, kind: input, shape index: {}]
  %s1 = inlined_call_operand.hbm [shape: f32[8,32], index: 1, kind: input, shape index: {}]
  %s2 = inlined_call_operand.hbm [shape: f32[8,128], index: 2, kind: output, shape index: {}]
  %s3 = sld [smem:[#allocation0]]
  $region34: #{tpu_custom_call.1} parent=0
    _
  %s5 = ssub.s32 1, %s3
  %s6 = scalar_select 0, %s5, %s3
  $region1: #{tpu_custom_call.1} parent=0
    #allocation5 [shape = 'u8[4096]{0}', space=vmem, size = 0x1000, scoped, tag = 'input window, operand 0, single buffered']
    #allocation6 [shape = 's32[1]{0}', space=sflag, size = 0x4, scoped, tag = 'scoped memory for tpu_custom_call.1']
    #allocation7 [shape = 's32[1]{0}', space=sflag, size = 0x4, scoped, tag = 'scoped memory for tpu_custom_call.1']
    #allocation8 [shape = 'u8[4096]{0}', space=vmem, size = 0x1000, scoped, tag = 'input window, operand 1, single buffered']
    #allocation9 [shape = 's32[1]{0}', space=sflag, size = 0x4, scoped, tag = 'scoped memory for tpu_custom_call.1']
    #allocation10 [shape = 'u8[4096]{0}', space=vmem, size = 0x1000, scoped, tag = 'output window, operand 0, single buffered']
    %7 = vsyncpa [#allocation6], 0
    %8 = vsyncpa [#allocation9], 0
    %9 = vsyncpa [#allocation7], 0
    // Predicated region
    $region2: #{tpu_custom_call.1} parent=1 // pred_check
      _
    $region3: #{tpu_custom_call.1} parent=1 // pred_check_branch
      %11 = sbr.rel (0) target = $region5
    $region4: #{tpu_custom_call.1} parent=1 // pred_region
      %13 = vsyncadd [#allocation6], 0
      %s15 = sshll.u32 %s0, 4
      %s16 = int_to_ptr.hbm [resolvable:$true] %s15
      %s17 = sshll.u32 [#allocation5], 4
      %s18 = int_to_ptr.vmem [resolvable:$true] %s17
      %20 = dma.hbm_to_vmem [thread:$0]  %s16, 128, %s18, [#allocation6]
    $region5: #{tpu_custom_call.1} parent=1 // pred_fallthru
      _
    // Predicated region
    $region6: #{tpu_custom_call.1} parent=1 // pred_check
      _
    $region7: #{tpu_custom_call.1} parent=1 // pred_check_branch
      %22 = sbr.rel (0) target = $region9
    $region8: #{tpu_custom_call.1} parent=1 // pred_region
      %24 = vsyncadd [#allocation9], 0
      %s26 = sshll.u32 %s1, 4
      %s27 = int_to_ptr.hbm [resolvable:$true] %s26
      %s28 = sshll.u32 [#allocation8], 4
      %s29 = int_to_ptr.vmem [resolvable:$true] %s28
      %31 = dma.hbm_to_vmem [thread:$0]  %s27, 128, %s29, [#allocation9]
    $region9: #{tpu_custom_call.1} parent=1 // pred_fallthru
      _
    // Predicated region
    $region10: #{tpu_custom_call.1} parent=1 // pred_check
      _
    $region11: #{tpu_custom_call.1} parent=1 // pred_check_branch
      %33 = sbr.rel (0) target = $region13
    $region12: #{tpu_custom_call.1} parent=1 // pred_region
      %35 = dma.done [#allocation6], 128
    $region13: #{tpu_custom_call.1} parent=1 // pred_fallthru
      _
    // Predicated region
    $region14: #{tpu_custom_call.1} parent=1 // pred_check
      _
    $region15: #{tpu_custom_call.1} parent=1 // pred_check_branch
      %37 = sbr.rel (0) target = $region17
    $region16: #{tpu_custom_call.1} parent=1 // pred_region
      %39 = dma.done [#allocation9], 128
    $region17: #{tpu_custom_call.1} parent=1 // pred_fallthru
      _
    %p40 = scmp.eq.s32.totalorder 0, 0
    // Predicated region
    $region18: #{tpu_custom_call.1} parent=1 // pred_check
      %p41 = pneg %p40
    $region19: #{tpu_custom_call.1} parent=1 // pred_check_branch
      %43 = sbr.rel (%p41) target = $region21
    $region20: #{tpu_custom_call.1} parent=1 // pred_region
      %vm44 = vcmask 64512
      %45 = vst.msk [vmem:[#allocation2] sm:$0xff] %vm44, 0.0
      %46 = vst.msk [vmem:[#allocation3] sm:$0xff] %vm44, 0.0
      %s47 = scalar_lea.smem [#allocation4], 0
      %48 = sst [smem:[%s47]] 0.0
      %s49 = scalar_lea.smem [#allocation4], 1
      %50 = sst [smem:[%s49]] 0.0
    $region21: #{tpu_custom_call.1} parent=1 // pred_fallthru
      _
    %v51 = vld [vmem:[#allocation5] sm:$0xff]
    %vm52 = vcmask 261120
    %v53 = vsel %vm52, %v51, 0.0
    %v54 = vrot.slane %v53, 4
    %v55 = vadd.f32 %v53, %v54
    %v56 = vrot.slane %v55, 2
    %v57 = vadd.f32 %v55, %v56
    %v58 = vrot.slane %v57, 1
    %v59 = vadd.f32 %v57, %v58
    %v60 = vrcp.pop 8.0
    %v61 = vmul.f32 8.0, %v60
    %v62 = vsub.f32 1.0, %v61
    %v63 = vmul.f32 %v60, %v62
    %v64 = vadd.f32 %v60, %v63
    %vm65 = vweird.f32 %v60
    %v66 = vsel %vm65, %v60, %v64
    %v67 = vmul.f32 %v59, %v66
    %v68 = vsub.f32 %v51, %v67
    %v69 = vmul.f32 %v68, %v68
    %v70 = vsel %vm52, %v69, 0.0
    %v71 = vrot.slane %v70, 4
    %v72 = vadd.f32 %v70, %v71
    %v73 = vrot.slane %v72, 2
    %v74 = vadd.f32 %v72, %v73
    %v75 = vrot.slane %v74, 1
    %v76 = vadd.f32 %v74, %v75
    %v77 = vmul.f32 %v76, 0.14285715
    %v78 = vrsqrt.pop %v77
    %v79 = vmul.f32 %v78, %v77
    %v80 = vmul.f32 %v79, %v78
    %v81 = vmul.f32 0.5, %v80
    %v82 = vsub.f32 1.5, %v81
    %v83 = vmul.f32 %v78, %v82
    %vm84 = vweird.f32 %v77
    %vm85 = vweird.f32 %v78
    %vm86 = vmor %vm84, %vm85
    %v87 = vsel %vm86, %v78, %v83
    %v88 = vmul.f32 %v87, 0.125
    %v89 = vmul.f32 %v68, %v88
    %v90 = vld [vmem:[#allocation8] sm:$0xff]
    %v91 = vsel %vm52, %v90, 0.0
    %v92 = vrot.slane %v91, 4
    %v93 = vadd.f32 %v91, %v92
    %v94 = vrot.slane %v93, 2
    %v95 = vadd.f32 %v93, %v94
    %v96 = vrot.slane %v95, 1
    %v97 = vadd.f32 %v95, %v96
    %v98 = vmul.f32 %v97, %v66
    %v99 = vsub.f32 %v90, %v98
    %v100 = vmul.f32 %v99, %v99
    %v101 = vsel %vm52, %v100, 0.0
    %v102 = vrot.slane %v101, 4
    %v103 = vadd.f32 %v101, %v102
    %v104 = vrot.slane %v103, 2
    %v105 = vadd.f32 %v103, %v104
    %v106 = vrot.slane %v105, 1
    %v107 = vadd.f32 %v105, %v106
    %v108 = vmul.f32 %v107, 0.14285715
    %v109 = vrsqrt.pop %v108
    %v110 = vmul.f32 %v109, %v108
    %v111 = vmul.f32 %v110, %v109
    %v112 = vmul.f32 0.5, %v111
    %v113 = vsub.f32 1.5, %v112
    %v114 = vmul.f32 %v109, %v113
    %vm115 = vweird.f32 %v108
    %vm116 = vweird.f32 %v109
    %vm117 = vmor %vm115, %vm116
    %v118 = vsel %vm117, %v109, %v114
    %v119 = vmul.f32 %v99, %v118
    %v120 = vmul.f32 %v89, %v119
    %v121 = vsel %vm52, %v120, 0.0
    %v122 = vrot.slane %v121, 4
    %v123 = vadd.f32 %v121, %v122
    %v124 = vrot.slane %v123, 2
    %v125 = vadd.f32 %v123, %v124
    %v126 = vrot.slane %v125, 1
    %v127 = vadd.f32 %v125, %v126
    %s128 = sld [smem:[#allocation4]]
    %vm129 = vcmask 253952
    %v130 = vsel %vm129, %v127, 0.0
    %131 = vadd.xlane.f32.xlu0 %v130
    %v132 = vpop.xlane.xlu0 %131
    %v133 = vrot.slane %v132, 4
    %v134 = vadd.f32 %v132, %v133
    %v135 = vrot.slane %v134, 2
    %v136 = vadd.f32 %v134, %v135
    %v137 = vrot.slane %v136, 1
    %v138 = vadd.f32 %v136, %v137
    %s139 = vtos %v138
    %s140 = sadd.f32 %s128, %s139
    %s141 = scalar_lea.smem [#allocation4], 0
    %142 = sst [smem:[%s141]] %s140
    %s143 = sld [smem:[#allocation4 + $0x1]]
    %v144 = vmul.f32 %v127, %v127
    %v145 = vsel %vm129, %v144, 0.0
    %146 = vadd.xlane.f32.xlu0 %v145
    %v147 = vpop.xlane.xlu0 %146
    %v148 = vrot.slane %v147, 4
    %v149 = vadd.f32 %v147, %v148
    %v150 = vrot.slane %v149, 2
    %v151 = vadd.f32 %v149, %v150
    %v152 = vrot.slane %v151, 1
    %v153 = vadd.f32 %v151, %v152
    %s154 = vtos %v153
    %s155 = sadd.f32 %s143, %s154
    %s156 = scalar_lea.smem [#allocation4], 1
    %157 = sst [smem:[%s156]] %s155
    %v158 = vld [vmem:[#allocation2] sm:$0xff]
    %v160 = vsel %vm52, %v89, 0
    %162 = vmatpush.xpose.msra.mxu0 0.0
    %163 = vmatpush.xpose.msra.mxu0 0.0
    %164 = vmatpush.xpose.msra.mxu0 0.0
    %165 = vmatpush.xpose.msra.mxu0 0.0
    %166 = vmatpush.xpose.msra.mxu0 0.0
    %167 = vmatpush.xpose.msra.mxu0 0.0
    %168 = vmatpush.xpose.msra.mxu0 0.0
    %169 = vmatpush.xpose.msra.mxu0 0.0
    %170 = vmatpush.xpose.msra.mxu0 0.0
    %171 = vmatpush.xpose.msra.mxu0 0.0
    %172 = vmatpush.xpose.msra.mxu0 0.0
    %173 = vmatpush.xpose.msra.mxu0 0.0
    %174 = vmatpush.xpose.msra.mxu0 0.0
    %175 = vmatpush.xpose.msra.mxu0 0.0
    %176 = vmatpush.xpose.msra.mxu0 0.0
    %177 = vmatpush.xpose.msra.mxu0 %v160
    %178 = vmatmul.f32.gmra.mxu0 %v160
    %v179 = vpop.f32.mrf.mxu0
    %v180 = vadd.f32 0.0, %v179
    %181 = vdwg.mxu0
    %v182 = vadd.f32 %v158, %v180
    %vm183 = vcmask 64512
    %184 = vst.msk [vmem:[#allocation2] sm:$0xff] %vm183, %v182
    %v185 = vld [vmem:[#allocation3] sm:$0xff]
    %v187 = vsel %vm52, %v119, 0
    %189 = vmatpush.xpose.msra.mxu0 0.0
    %190 = vmatpush.xpose.msra.mxu0 0.0
    %191 = vmatpush.xpose.msra.mxu0 0.0
    %192 = vmatpush.xpose.msra.mxu0 0.0
    %193 = vmatpush.xpose.msra.mxu0 0.0
    %194 = vmatpush.xpose.msra.mxu0 0.0
    %195 = vmatpush.xpose.msra.mxu0 0.0
    %196 = vmatpush.xpose.msra.mxu0 0.0
    %197 = vmatpush.xpose.msra.mxu0 0.0
    %198 = vmatpush.xpose.msra.mxu0 0.0
    %199 = vmatpush.xpose.msra.mxu0 0.0
    %200 = vmatpush.xpose.msra.mxu0 0.0
    %201 = vmatpush.xpose.msra.mxu0 0.0
    %202 = vmatpush.xpose.msra.mxu0 0.0
    %203 = vmatpush.xpose.msra.mxu0 0.0
    %204 = vmatpush.xpose.msra.mxu0 %v187
    %205 = vmatmul.f32.gmra.mxu0 %v187
    %v206 = vpop.f32.mrf.mxu0
    %v207 = vadd.f32 0.0, %v206
    %208 = vdwg.mxu0
    %v209 = vadd.f32 %v185, %v207
    %210 = vst.msk [vmem:[#allocation3] sm:$0xff] %vm183, %v209
    // Predicated region
    $region22: #{tpu_custom_call.1} parent=1 // pred_check
      %p211 = pneg %p40
    $region23: #{tpu_custom_call.1} parent=1 // pred_check_branch
      %213 = sbr.rel (%p211) target = $region25
    $region24: #{tpu_custom_call.1} parent=1 // pred_region
      %v214 = vld [vmem:[#allocation2] sm:$0xff]
      %v215 = vld [vmem:[#allocation3] sm:$0xff]
      %v216 = vmul.f32 %v214, %v215
      %v217 = vsel %vm183, %v216, 0.0
      %218 = vadd.xlane.f32.xlu0 %v217
      %v219 = vpop.xlane.xlu0 %218
      %v220 = vrot.slane %v219, 4
      %v221 = vadd.f32 %v219, %v220
      %v222 = vrot.slane %v221, 2
      %v223 = vadd.f32 %v221, %v222
      %v224 = vrot.slane %v223, 1
      %v225 = vadd.f32 %v223, %v224
      %s226 = vtos %v225
      %s227 = smul.f32 %s226, 0.005
      %s228 = sld [smem:[#allocation4 + $0x1]]
      %s229 = smul.f32 %s228, 0.995
      %s230 = sadd.f32 %s227, %s229
      %s231 = sld [smem:[#allocation4]]
      %s232 = smul.f32 %s231, 2.0
      %s233 = ssub.f32 %s230, %s232
      %s234 = sadd.f32 %s233, 32.0
      %v235 = vlaneseq
      %v236 = vshrl.u32 %v235, 7
      %v237 = vlaneseq
      %v238 = vand.u32 %v237, 127
      %vm239 = vcmp.eq.s32.totalorder %v236, 0
      %vm240 = vcmp.eq.s32.totalorder %v238, 0
      %vm241 = vmand %vm239, %vm240
      %v242 = vstv %s234
      %v243 = vsel %vm241, %v242, 0.0
      %244 = vst [vmem:[#allocation10] sm:$0xff] %v243
    $region25: #{tpu_custom_call.1} parent=1 // pred_fallthru
      _
    // Predicated region
    $region26: #{tpu_custom_call.1} parent=1 // pred_check
      _
    $region27: #{tpu_custom_call.1} parent=1 // pred_check_branch
      %246 = sbr.rel (0) target = $region29
    $region28: #{tpu_custom_call.1} parent=1 // pred_region
      %248 = vsyncadd [#allocation7], 0
      %s250 = sshll.u32 [#allocation10], 4
      %s251 = int_to_ptr.vmem [resolvable:$true] %s250
      %s252 = sshll.u32 %s2, 4
      %s253 = int_to_ptr.hbm [resolvable:$true] %s252
      %255 = dma.vmem_to_hbm [thread:$0]  %s251, 128, %s253, [#allocation7]
    $region29: #{tpu_custom_call.1} parent=1 // pred_fallthru
      _
    // Predicated region
    $region30: #{tpu_custom_call.1} parent=1 // pred_check
      _
    $region31: #{tpu_custom_call.1} parent=1 // pred_check_branch
      %257 = sbr.rel (0) target = $region33
    $region32: #{tpu_custom_call.1} parent=1 // pred_region
      %259 = dma.done [#allocation7], 128
    $region33: #{tpu_custom_call.1} parent=1 // pred_fallthru
      _
    %260 = vsyncpa [#allocation6], 1
    %261 = vsyncpa [#allocation9], 1
    %262 = vsyncpa [#allocation7], 1

</llo_original>
